<compile_context>
chip_gen: v7x
topology: tpu7x:2x2x1
jax: 0.10.0
libtpu: 0.0.40
codegen_flags: <defaults>
</compile_context>

<pallas_src>
import functools

import jax
import jax.numpy as jnp
import numpy as np
from jax.experimental import pallas as pl
from jax.experimental.pallas import tpu as pltpu


# -----------------------------------------------------------------------------
# Helpers
# -----------------------------------------------------------------------------
def _choose_time_chunk(seq_len, max_chunk):
    """Largest divisor of seq_len that is <= max_chunk (>= 1)."""
    for d in range(min(seq_len, max_chunk), 0, -1):
        if seq_len % d == 0:
            return d
    return seq_len


# -----------------------------------------------------------------------------
# Stage 1: layer-0 input projection (one big parallel matmul over the sequence)
# -----------------------------------------------------------------------------
def _proj_kernel(x_ref, w_ref, b_ref, o_ref, *, compute_dtype):
    o_ref[...] = (
        jnp.dot(
            x_ref[...].astype(compute_dtype),
            w_ref[...].astype(compute_dtype),
            preferred_element_type=jnp.float32,
        )
        + b_ref[...]
    ).astype(o_ref.dtype)


def _input_projection(x2, wx, b, row_tile, compute_dtype):
    """x2: (rows, D) -> (rows, 4H) = x2 @ wx + b, tiled over rows (parallel grid)."""
    rows, d_in = x2.shape
    g = wx.shape[1]
    kernel = functools.partial(_proj_kernel, compute_dtype=compute_dtype)
    return pl.pallas_call(
        kernel,
        out_shape=jax.ShapeDtypeStruct((rows, g), jnp.float32),
        grid_spec=pltpu.PrefetchScalarGridSpec(
            num_scalar_prefetch=0,
            grid=(rows // row_tile,),
            in_specs=[
                pl.BlockSpec((row_tile, d_in), lambda i: (i, 0)),
                pl.BlockSpec((d_in, g), lambda i: (0, 0)),
                pl.BlockSpec((1, g), lambda i: (0, 0)),
            ],
            out_specs=pl.BlockSpec((row_tile, g), lambda i: (i, 0)),
        ),
        compiler_params=pltpu.CompilerParams(
            dimension_semantics=("parallel",),
        ),
    )(x2, wx, b)


# -----------------------------------------------------------------------------
# Stage 2: fused multi-layer recurrence + fc head
# -----------------------------------------------------------------------------
def _fused_lstm_kernel(*refs, hidden, num_layers, tc, batch, compute_dtype):
    """Grid axis 0 = time chunks (sequential).  All layers + fc in one kernel.

    refs layout:
      inputs : xg0, wh[0..L-1], wx[1..L-1], b[1..L-1], fc_w, fc_b
      outputs: out (B, 1)          (resident block, written in the last chunk)
      scratch: h_carry (L,B,H), c_carry (L,B,H), chunk_buf (tc*B, H)
    """
    H = hidden
    L = num_layers
    B = batch
    n_in = 1 + L + 2 * (L - 1) + 2

    in_refs = refs[:n_in]
    out_ref = refs[n_in]
    h_sc, c_sc, buf_sc = refs[n_in + 1:]

    xg0_ref = in_refs[0]
    wh_refs = in_refs[1:1 + L]
    wx_refs = in_refs[1 + L:2 * L]            # layers 1..L-1
    b_refs = in_refs[2 * L:3 * L - 1]         # layers 1..L-1
    fcw_ref = in_refs[n_in - 2]
    fcb_ref = in_refs[n_in - 1]

    chunk = pl.program_id(0)

    @pl.when(chunk == 0)
    def _init():
        # PyTorch init_hidden: zeros for every layer.
        h_sc[...] = jnp.zeros_like(h_sc)
        c_sc[...] = jnp.zeros_like(c_sc)

    def lstm_cell(gates, c_prev):
        # NOTE: with H < 128 these gate slices are sub-lane extracts; for
        # production sizes keep H a multiple of 128 so they are lane-aligned.
        i_g = jax.nn.sigmoid(gates[:, 0 * H:1 * H])
        f_g = jax.nn.sigmoid(gates[:, 1 * H:2 * H])
        g_g = jnp.tanh(gates[:, 2 * H:3 * H])
        o_g = jax.nn.sigmoid(gates[:, 3 * H:4 * H])
        c_new = f_g * c_prev + i_g * g_g
        h_new = o_g * jnp.tanh(c_new)
        return h_new, c_new

    # ---- layer 0: x-projection was precomputed outside the serial chain; only
    #      h_{t-1} @ W_hh remains on the per-step critical path.
    xg_chunk = xg0_ref[...]                                   # (tc, B, 4H)
    wh = wh_refs[0][...].astype(compute_dtype)                # hoisted weight load
    h = h_sc[0]
    c = c_sc[0]
    for t in range(tc):                                       # static unroll over chunk
        gates = xg_chunk[t] + jnp.dot(
            h.astype(compute_dtype), wh, preferred_element_type=jnp.float32)
        h, c = lstm_cell(gates, c)
        buf_sc[t * B:(t + 1) * B, :] = h                      # 8-row aligned store
    h_sc[0] = h
    c_sc[0] = c

    # ---- layers 1..L-1: chunk-level input projection as ONE 2-D matmul (off the
    #      per-step recurrent chain), then the serial cell loop.  The chunk buffer
    #      is overwritten in place (step t is read before it is rewritten).
    for l in range(1, L):
        xg_l = jnp.dot(
            buf_sc[...].astype(compute_dtype),
            wx_refs[l - 1][...].astype(compute_dtype),
            preferred_element_type=jnp.float32,
        ) + b_refs[l - 1][...]                                # (tc*B, 4H)
        wh = wh_refs[l][...].astype(compute_dtype)
        h = h_sc[l]
        c = c_sc[l]
        for t in range(tc):
            gates = xg_l[t * B:(t + 1) * B, :] + jnp.dot(
                h.astype(compute_dtype), wh, preferred_element_type=jnp.float32)
            h, c = lstm_cell(gates, c)
            buf_sc[t * B:(t + 1) * B, :] = h
        h_sc[l] = h
        c_sc[l] = c

    # ---- fc head fused into the epilogue of the last chunk:
    #      out = h_T^{(last layer)} @ W_fc + b_fc   (dropout = 0.0 -> identity)
    @pl.when(chunk == pl.num_programs(0) - 1)
    def _finish():
        out_ref[...] = (
            jnp.dot(h, fcw_ref[...], preferred_element_type=jnp.float32)
            + fcb_ref[...]
        ).astype(out_ref.dtype)


# -----------------------------------------------------------------------------
# Full forward wrapper
# -----------------------------------------------------------------------------
def lstm_model_forward(x, params, *, time_chunk=8, compute_dtype=jnp.float32):
    """x: (B, T, input_size), batch_first like PyTorch.  Returns (B, 1)."""
    layers = params["layers"]
    L = len(layers)
    H = params["hidden_size"]
    B, T, D = x.shape
    G = 4 * H

    # Pad batch to a multiple of 8 (sublane width); padded rows are independent
    # and are sliced away at the end.
    B_pad = ((B + 7) // 8) * 8
    x_tm = jnp.transpose(x.astype(jnp.float32), (1, 0, 2))     # (T, B, D): only the tiny
    if B_pad != B:                                             # raw input is re-laid-out;
        x_tm = jnp.pad(x_tm, ((0, 0), (0, B_pad - B), (0, 0))) # activations stay in VMEM.

    tc = _choose_time_chunk(T, time_chunk)
    n_chunks = T // tc

    # ---- stage 1: layer-0 input projection over the whole sequence.
    rows = T * B_pad
    row_tile = B_pad * _choose_time_chunk(T, max(1, 1024 // B_pad))
    xg0 = _input_projection(
        x_tm.reshape(rows, D), layers[0]["wx"], layers[0]["b"], row_tile, compute_dtype)
    xg0 = xg0.reshape(T, B_pad, G)

    # ---- stage 2: fused recurrence over all layers + fc epilogue.
    operands = [xg0]
    operands += [layers[l]["wh"] for l in range(L)]
    operands += [layers[l]["wx"] for l in range(1, L)]
    operands += [layers[l]["b"] for l in range(1, L)]
    operands += [params["fc_w"], params["fc_b"]]

    const2 = lambda c: (0, 0)
    # NOTE: for very large H these constant-index weight specs can be single-
    # buffered via pipeline_mode=pl.Buffered(1) to halve their VMEM footprint.
    in_specs = [pl.BlockSpec((tc, B_pad, G), lambda c: (c, 0, 0))]      # xg0 chunk
    in_specs += [pl.BlockSpec((H, G), const2) for _ in range(L)]        # wh
    in_specs += [pl.BlockSpec((H, G), const2) for _ in range(L - 1)]    # wx (l>0)
    in_specs += [pl.BlockSpec((1, G), const2) for _ in range(L - 1)]    # b  (l>0)
    in_specs += [pl.BlockSpec((H, 1), const2), pl.BlockSpec((1, 1), const2)]

    kernel = functools.partial(
        _fused_lstm_kernel, hidden=H, num_layers=L, tc=tc, batch=B_pad,
        compute_dtype=compute_dtype)

    out = pl.pallas_call(
        kernel,
        out_shape=jax.ShapeDtypeStruct((B_pad, 1), jnp.float32),
        grid_spec=pltpu.PrefetchScalarGridSpec(
            num_scalar_prefetch=0,
            grid=(n_chunks,),
            in_specs=in_specs,
            out_specs=pl.BlockSpec((B_pad, 1), const2),   # resident, written last chunk
            scratch_shapes=[
                pltpu.VMEM((L, B_pad, H), jnp.float32),   # h carry, all layers
                pltpu.VMEM((L, B_pad, H), jnp.float32),   # c carry, all layers
                pltpu.VMEM((tc * B_pad, H), jnp.float32), # prev-layer chunk outputs
            ],
        ),
        compiler_params=pltpu.CompilerParams(
            dimension_semantics=("arbitrary",),           # time chunks are sequential
        ),
    )(*operands)
    return out[:B]


# -----------------------------------------------------------------------------
# Deterministic parameter construction (shapes per nn.LSTM / nn.Linear)
# -----------------------------------------------------------------------------
def init_params(key, input_size, hidden_size, num_layers):
    bound = 1.0 / jnp.sqrt(jnp.float32(hidden_size))
    layers = []
    for layer_idx in range(num_layers):
        d_in = input_size if layer_idx == 0 else hidden_size
        key, k1, k2, k3, k4 = jax.random.split(key, 5)
        w_ih = jax.random.uniform(k1, (4 * hidden_size, d_in), jnp.float32, -bound, bound)
        w_hh = jax.random.uniform(k2, (4 * hidden_size, hidden_size), jnp.float32, -bound, bound)
        b_ih = jax.random.uniform(k3, (4 * hidden_size,), jnp.float32, -bound, bound)
        b_hh = jax.random.uniform(k4, (4 * hidden_size,), jnp.float32, -bound, bound)
        layers.append({
            "wx": w_ih.T,                                  # (D, 4H), pre-transposed
            "wh": w_hh.T,                                  # (H, 4H)
            "b": (b_ih + b_hh).reshape(1, 4 * hidden_size),
        })
    key, k5, k6 = jax.random.split(key, 3)
    fc_w = jax.random.uniform(k5, (1, hidden_size), jnp.float32, -bound, bound)
    fc_b = jax.random.uniform(k6, (1,), jnp.float32, -bound, bound)
    return {
        "hidden_size": hidden_size,
        "layers": layers,
        "fc_w": fc_w.T,                                    # (H, 1)
        "fc_b": fc_b.reshape(1, 1),
    }


# -----------------------------------------------------------------------------
# Pure-JAX reference (for a sanity check against the kernel)
# -----------------------------------------------------------------------------
def lstm_reference(x, params):
    H = params["hidden_size"]
    B = x.shape[0]
    with jax.default_matmul_precision("highest"):
        seq = jnp.transpose(x.astype(jnp.float32), (1, 0, 2))    # (T, B, D)
        for layer in params["layers"]:
            wx, wh, b = layer["wx"], layer["wh"], layer["b"]

            def step(carry, x_t, wx=wx, wh=wh, b=b):
                h, c = carry
                g = x_t @ wx + h @ wh + b[0]
                i = jax.nn.sigmoid(g[:, 0 * H:1 * H])
                f = jax.nn.sigmoid(g[:, 1 * H:2 * H])
                gg = jnp.tanh(g[:, 2 * H:3 * H])
                o = jax.nn.sigmoid(g[:, 3 * H:4 * H])
                c = f * c + i * gg
                h = o * jnp.tanh(c)
                return (h, c), h

            init = (jnp.zeros((B, H), jnp.float32), jnp.zeros((B, H), jnp.float32))
            _, seq = jax.lax.scan(step, init, seq)
        return seq[-1] @ params["fc_w"] + params["fc_b"]


if __name__ == "__main__":
    batch, seq_len = 2, 8
    input_size, hidden_size, num_layers = 4, 32, 2

    key = jax.random.PRNGKey(0)
    key, kx = jax.random.split(key)
    x = jax.random.normal(kx, (batch, seq_len, input_size), jnp.float32)

    params = init_params(key, input_size, hidden_size, num_layers)

    # time_chunk=4 -> 2 time chunks, exercising the cross-chunk h/c carry path.
    out = lstm_model_forward(x, params, time_chunk=4)
    out = jax.block_until_ready(out)
    assert out.shape == (batch, 1), out.shape

    ref = jax.block_until_ready(lstm_reference(x, params))
    np.testing.assert_allclose(np.asarray(out), np.asarray(ref), rtol=2e-2, atol=2e-2)

    print("KERNEL_OK")
</pallas_src>

<mosaic_0001>
module attributes {stable_mosaic.version = 11 : i64} {
  func.func @_proj_kernel(%arg0: i32, %arg1: memref<64x4xf32, #tpu.memory_space<vmem>>, %arg2: memref<4x128xf32, #tpu.memory_space<vmem>>, %arg3: memref<1x128xf32, #tpu.memory_space<vmem>>, %arg4: memref<64x128xf32, #tpu.memory_space<vmem>>) attributes {dimension_semantics = [#tpu.dimension_semantics<parallel>], iteration_bounds = array<i64: 1>, scalar_prefetch = 0 : i64, scratch_operands = 0 : i64, tpu.core_type = #tpu.core_type<tc>, window_params = [{transform_indices = @transform_0, window_bounds = array<i64: 64, 4>}, {pipeline_mode = #tpu.pipeline_mode<synchronous>, transform_indices = @transform_1, window_bounds = array<i64: 4, 128>}, {pipeline_mode = #tpu.pipeline_mode<synchronous>, transform_indices = @transform_2, window_bounds = array<i64: 1, 128>}, {transform_indices = @transform_3, window_bounds = array<i64: 64, 128>}]} {
    %c0 = arith.constant 0 : index
    %c0_0 = arith.constant 0 : index
    %0 = vector.load %arg1[%c0, %c0_0] : memref<64x4xf32, #tpu.memory_space<vmem>>, vector<64x4xf32>
    %c0_1 = arith.constant 0 : index
    %c0_2 = arith.constant 0 : index
    %1 = vector.load %arg2[%c0_1, %c0_2] : memref<4x128xf32, #tpu.memory_space<vmem>>, vector<4x128xf32>
    %cst = arith.constant dense<0.000000e+00> : vector<64x128xf32>
    %2 = tpu.matmul %0, %1, %cst {dimension_numbers = #tpu.dot_dimension_numbers<[1], [0], [0], [1], [0, 0, 1, 1], [], []>} : vector<64x4xf32>, vector<4x128xf32>, vector<64x128xf32> -> vector<64x128xf32>
    %c0_3 = arith.constant 0 : index
    %c0_4 = arith.constant 0 : index
    %3 = vector.load %arg3[%c0_3, %c0_4] : memref<1x128xf32, #tpu.memory_space<vmem>>, vector<1x128xf32>
    %4 = vector.broadcast %3 : vector<1x128xf32> to vector<64x128xf32>
    %5 = arith.addf %2, %4 : vector<64x128xf32>
    %c0_5 = arith.constant 0 : index
    %c0_6 = arith.constant 0 : index
    %6 = vector.load %arg4[%c0_5, %c0_6] : memref<64x128xf32, #tpu.memory_space<vmem>>, vector<64x128xf32>
    tpu.vector_store %arg4[%c0_5, %c0_6], %5 {strides = array<i32>} : memref<64x128xf32, #tpu.memory_space<vmem>>, vector<64x128xf32>,
    return
  }
  func.func @transform_0(%arg0: i32) -> (i32, i32) {
    %c0_i32 = arith.constant 0 : i32
    %c0_i32_0 = arith.constant 0 : i32
    return %arg0, %c0_i32 : i32, i32
  }
  func.func @transform_1(%arg0: i32) -> (i32, i32) {
    %c0_i32 = arith.constant 0 : i32
    %c0_i32_0 = arith.constant 0 : i32
    %c0_i32_1 = arith.constant 0 : i32
    return %c0_i32, %c0_i32_0 : i32, i32
  }
  func.func @transform_2(%arg0: i32) -> (i32, i32) {
    %c0_i32 = arith.constant 0 : i32
    %c0_i32_0 = arith.constant 0 : i32
    %c0_i32_1 = arith.constant 0 : i32
    return %c0_i32, %c0_i32_0 : i32, i32
  }
  func.func @transform_3(%arg0: i32) -> (i32, i32) {
    %c0_i32 = arith.constant 0 : i32
    %c0_i32_0 = arith.constant 0 : i32
    return %arg0, %c0_i32 : i32, i32
  }
}

</mosaic_0001>

<llo_original>
// kernel: tpu_custom_call.1
$region0: #{tpu_custom_call.1}
  #allocation0 [shape = 'u32[]', space=smem, size = 0x4, offset = 0x4, fixed_abs, tag = 'smem constant byte address 0x4 - core index']
  #allocation1 [shape = 'u32[144,128]{1,0:T(1,128)}', space=vmem, size = 0x12000, scoped, tag = 'internal scratch']
  %s0 = inlined_call_operand.vmem [shape: f32[64,4], index: 0, kind: input, shape index: {}]
  %s1 = inlined_call_operand.vmem [shape: f32[4,128], index: 1, kind: input, shape index: {}]
  %s2 = inlined_call_operand.vmem [shape: f32[1,128], index: 2, kind: input, shape index: {}]
  %s3 = inlined_call_operand.hbm [shape: f32[64,128], index: 3, kind: output, shape index: {}]
  %s4 = sld [smem:[#allocation0]]
  $region22: #{tpu_custom_call.1} parent=0
    _
  %s6 = ssub.s32 1, %s4
  %s7 = scalar_select 0, %s6, %s4
  $region1: #{tpu_custom_call.1} parent=0
    #allocation2 [shape = 'u8[32768]{0}', space=vmem, size = 0x8000, scoped, tag = 'output window, operand 0, single buffered']
    #allocation3 [shape = 's32[1]{0}', space=sflag, size = 0x4, scoped, tag = 'scoped memory for tpu_custom_call.1']
    %8 = vsyncpa [#allocation3], 0
    // Predicated region
    $region2: #{tpu_custom_call.1} parent=1 // pred_check
      _
    $region3: #{tpu_custom_call.1} parent=1 // pred_check_branch
      %10 = sbr.rel (0) target = $region5
    $region4: #{tpu_custom_call.1} parent=1 // pred_region
      _
    $region5: #{tpu_custom_call.1} parent=1 // pred_fallthru
      _
    // Predicated region
    $region6: #{tpu_custom_call.1} parent=1 // pred_check
      _
    $region7: #{tpu_custom_call.1} parent=1 // pred_check_branch
      %12 = sbr.rel (0) target = $region9
    $region8: #{tpu_custom_call.1} parent=1 // pred_region
      _
    $region9: #{tpu_custom_call.1} parent=1 // pred_fallthru
      _
    // Predicated region
    $region10: #{tpu_custom_call.1} parent=1 // pred_check
      _
    $region11: #{tpu_custom_call.1} parent=1 // pred_check_branch
      %14 = sbr.rel (0) target = $region13
    $region12: #{tpu_custom_call.1} parent=1 // pred_region
      _
    $region13: #{tpu_custom_call.1} parent=1 // pred_fallthru
      _
    %v15 = vld [vmem:[%s0] sm:$0xff]
    %v16 = vld [vmem:[%s0 + $0x8] sm:$0xff]
    %v17 = vld [vmem:[%s0 + $0x10] sm:$0xff]
    %v18 = vld [vmem:[%s0 + $0x18] sm:$0xff]
    %v19 = vld [vmem:[%s0 + $0x20] sm:$0xff]
    %v20 = vld [vmem:[%s0 + $0x28] sm:$0xff]
    %v21 = vld [vmem:[%s0 + $0x30] sm:$0xff]
    %v22 = vld [vmem:[%s0 + $0x38] sm:$0xff]
    %v23 = vld [vmem:[%s1] sm:$0xf]
    %v24 = vld [vmem:[%s2] sm:$0x1]
    %v26 = vlaneseq
    %v27 = vshrl.u32 %v26, 7
    %v28 = vsub.s32 0, %v27
    %v29 = vrot.slane %v24, %v28
    %vm31 = vcmask 31744
    %v33 = vsel %vm31, %v15, 0
    %v36 = vsel %vm31, %v16, 0
    %v39 = vsel %vm31, %v17, 0
    %v42 = vsel %vm31, %v18, 0
    %v45 = vsel %vm31, %v19, 0
    %v48 = vsel %vm31, %v20, 0
    %v51 = vsel %vm31, %v21, 0
    %v54 = vsel %vm31, %v22, 0
    %vm56 = vcmask 1043456
    %v58 = vsel %vm56, %v23, 0
    %60 = vmatprep.subr.mxu0 0.0
    %61 = vmatpush1.msra.mxu0 %v58
    %62 = vmatprep.subr.mxu0 0.0
    %63 = vmatpush1.msra.mxu0 0.0
    %64 = vmatprep.subr.mxu0 0.0
    %65 = vmatpush1.msra.mxu0 0.0
    %66 = vmatprep.subr.mxu0 0.0
    %67 = vmatpush1.msra.mxu0 0.0
    %68 = vmatprep.subr.mxu0 0.0
    %69 = vmatpush1.msra.mxu0 0.0
    %70 = vmatprep.subr.mxu0 0.0
    %71 = vmatpush1.msra.mxu0 0.0
    %72 = vmatprep.subr.mxu0 0.0
    %73 = vmatpush1.msra.mxu0 0.0
    %74 = vmatprep.subr.mxu0 0.0
    %75 = vmatpush1.msra.mxu0 0.0
    %76 = vmatprep.subr.mxu0 0.0
    %77 = vmatpush1.msra.mxu0 0.0
    %78 = vmatprep.subr.mxu0 0.0
    %79 = vmatpush1.msra.mxu0 0.0
    %80 = vmatprep.subr.mxu0 0.0
    %81 = vmatpush1.msra.mxu0 0.0
    %82 = vmatprep.subr.mxu0 0.0
    %83 = vmatpush1.msra.mxu0 0.0
    %84 = vmatprep.subr.mxu0 0.0
    %85 = vmatpush1.msra.mxu0 0.0
    %86 = vmatprep.subr.mxu0 0.0
    %87 = vmatpush1.msra.mxu0 0.0
    %88 = vmatprep.subr.mxu0 0.0
    %89 = vmatpush1.msra.mxu0 0.0
    %90 = vmatprep.subr.mxu0 0.0
    %91 = vmatpush1.msra.mxu0 0.0
    %92 = vmatprep.subr.mxu0 0.0
    %93 = vmatpush1.msra.mxu0 0.0
    %94 = vmatprep.subr.mxu0 0.0
    %95 = vmatpush1.msra.mxu0 0.0
    %96 = vmatprep.subr.mxu0 0.0
    %97 = vmatpush1.msra.mxu0 0.0
    %98 = vmatprep.subr.mxu0 0.0
    %99 = vmatpush1.msra.mxu0 0.0
    %100 = vmatprep.subr.mxu0 0.0
    %101 = vmatpush1.msra.mxu0 0.0
    %102 = vmatprep.subr.mxu0 0.0
    %103 = vmatpush1.msra.mxu0 0.0
    %104 = vmatprep.subr.mxu0 0.0
    %105 = vmatpush1.msra.mxu0 0.0
    %106 = vmatprep.subr.mxu0 0.0
    %107 = vmatpush1.msra.mxu0 0.0
    %108 = vmatprep.subr.mxu0 0.0
    %109 = vmatpush1.msra.mxu0 0.0
    %110 = vmatprep.subr.mxu0 0.0
    %111 = vmatpush1.msra.mxu0 0.0
    %112 = vmatprep.subr.mxu0 0.0
    %113 = vmatpush1.msra.mxu0 0.0
    %114 = vmatprep.subr.mxu0 0.0
    %115 = vmatpush1.msra.mxu0 0.0
    %116 = vmatprep.subr.mxu0 0.0
    %117 = vmatpush1.msra.mxu0 0.0
    %118 = vmatprep.subr.mxu0 0.0
    %119 = vmatpush1.msra.mxu0 0.0
    %120 = vmatprep.subr.mxu0 0.0
    %121 = vmatpush1.msra.mxu0 0.0
    %122 = vmatprep.subr.mxu0 0.0
    %123 = vmatpush1.msra.mxu0 0.0
    %124 = vmatprep.mubr.f32.mxu0 0.0
    %125 = vmatmul.mubr.f32.gmra.mrb[0].mxu0 %v33
    %v126 = vpop.f32.mrb[0].mxu0
    %v127 = vadd.f32 %v29, %v126
    %v128 = vpop.f32.mrb[0].mxu0
    %129 = vmatprep.mubr.f32.mxu0 0.0
    %130 = vmatmul.mubr.f32.gmra.mrb[0].mxu0 %v36
    %v131 = vpop.f32.mrb[0].mxu0
    %v132 = vadd.f32 %v29, %v131
    %v133 = vpop.f32.mrb[0].mxu0
    %134 = vmatprep.mubr.f32.mxu0 0.0
    %135 = vmatmul.mubr.f32.gmra.mrb[0].mxu0 %v39
    %v136 = vpop.f32.mrb[0].mxu0
    %v137 = vadd.f32 %v29, %v136
    %v138 = vpop.f32.mrb[0].mxu0
    %139 = vmatprep.mubr.f32.mxu0 0.0
    %140 = vmatmul.mubr.f32.gmra.mrb[0].mxu0 %v42
    %v141 = vpop.f32.mrb[0].mxu0
    %v142 = vadd.f32 %v29, %v141
    %v143 = vpop.f32.mrb[0].mxu0
    %144 = vmatprep.mubr.f32.mxu0 0.0
    %145 = vmatmul.mubr.f32.gmra.mrb[0].mxu0 %v45
    %v146 = vpop.f32.mrb[0].mxu0
    %v147 = vadd.f32 %v29, %v146
    %v148 = vpop.f32.mrb[0].mxu0
    %149 = vmatprep.mubr.f32.mxu0 0.0
    %150 = vmatmul.mubr.f32.gmra.mrb[0].mxu0 %v48
    %v151 = vpop.f32.mrb[0].mxu0
    %v152 = vadd.f32 %v29, %v151
    %v153 = vpop.f32.mrb[0].mxu0
    %154 = vmatprep.mubr.f32.mxu0 0.0
    %155 = vmatmul.mubr.f32.gmra.mrb[0].mxu0 %v51
    %v156 = vpop.f32.mrb[0].mxu0
    %v157 = vadd.f32 %v29, %v156
    %v158 = vpop.f32.mrb[0].mxu0
    %159 = vmatprep.mubr.f32.mxu0 0.0
    %160 = vmatmul.mubr.f32.gmra.mrb[0].mxu0 %v54
    %v161 = vpop.f32.mrb[0].mxu0
    %v162 = vadd.f32 %v29, %v161
    %v163 = vpop.f32.mrb[0].mxu0
    %164 = vdwg.mxu0
    %165 = vst [vmem:[#allocation2] sm:$0xff] %v127
    %166 = vst [vmem:[#allocation2 + $0x8] sm:$0xff] %v132
    %167 = vst [vmem:[#allocation2 + $0x10] sm:$0xff] %v137
    %168 = vst [vmem:[#allocation2 + $0x18] sm:$0xff] %v142
    %169 = vst [vmem:[#allocation2 + $0x20] sm:$0xff] %v147
    %170 = vst [vmem:[#allocation2 + $0x28] sm:$0xff] %v152
    %171 = vst [vmem:[#allocation2 + $0x30] sm:$0xff] %v157
    %172 = vst [vmem:[#allocation2 + $0x38] sm:$0xff] %v162
    // Predicated region
    $region14: #{tpu_custom_call.1} parent=1 // pred_check
      _
    $region15: #{tpu_custom_call.1} parent=1 // pred_check_branch
      %174 = sbr.rel (0) target = $region17
    $region16: #{tpu_custom_call.1} parent=1 // pred_region
      %s176 = ssub.s32 1024, 1024
      %177 = vsyncadd [#allocation3], %s176
      %s178 = sshll.u32 [#allocation2], 4
      %s179 = int_to_ptr.vmem [resolvable:$true] %s178
      %184 = dma.vmem_to_hbm [thread:$0]  %s179, 1024, %s3, [#allocation3], 128, 128, 8
    $region17: #{tpu_custom_call.1} parent=1 // pred_fallthru
      _
    // Predicated region
    $region18: #{tpu_custom_call.1} parent=1 // pred_check
      _
    $region19: #{tpu_custom_call.1} parent=1 // pred_check_branch
      %186 = sbr.rel (0) target = $region21
    $region20: #{tpu_custom_call.1} parent=1 // pred_region
      %187 = dma.done [#allocation3], 1024
    $region21: #{tpu_custom_call.1} parent=1 // pred_fallthru
      _
    %188 = vsyncpa [#allocation3], 1

</llo_original>
